<compile_context>
chip_gen: v7x
topology: tpu7x:2x2x1
jax: 0.10.0
libtpu: 0.0.40
codegen_flags: <defaults>
</compile_context>

<pallas_src>
import functools

import jax
import jax.numpy as jnp
from jax.experimental import pallas as pl
from jax.experimental.pallas import tpu as pltpu


def _round_up(x, m):
    return ((x + m - 1) // m) * m


def rnn_seq_kernel(x_ref, h0_ref, wx_ref, wh_ref, b_ref, out_ref, h_scratch,
                   *, hidden_size, output_size):
    H = hidden_size
    O = output_size
    t = pl.program_id(0)

    # Initialize the carried hidden state once (P3 accumulator pattern).
    @pl.when(t == 0)
    def _():
        h_scratch[...] = h0_ref[...]

    x = x_ref[0]            # [B_pad, I]
    h = h_scratch[...]      # [B_pad, H]

    # One fused pre-activation: columns [0, H) -> new hidden, [H, H+O) -> logits,
    # [H+O, N_pad) -> zero padding (weights / bias are zero there).
    pre = (jnp.dot(x, wx_ref[...], preferred_element_type=jnp.float32)
           + jnp.dot(h, wh_ref[...], preferred_element_type=jnp.float32)
           + b_ref[...])    # [B_pad, N_pad]

    # Masked, numerically stable log_softmax over the logits columns only.
    col = jax.lax.broadcasted_iota(jnp.int32, pre.shape, 1)
    logit_mask = (col >= H) & (col < H + O)

    m = jnp.max(jnp.where(logit_mask, pre, -jnp.inf), axis=1, keepdims=True)
    shifted = pre - m
    expv = jnp.where(logit_mask, jnp.exp(shifted), 0.0)
    lse = jnp.log(jnp.sum(expv, axis=1, keepdims=True))
    logp = shifted - lse

    # Lane-dense output slab: [ hidden' | log_softmax(logits) | ignored padding ].
    out_ref[0] = jnp.where(col < H, pre, logp).astype(out_ref.dtype)

    # Carry the hidden state in VMEM scratch (no HBM writeback per step).
    h_scratch[...] = pre[:, :H]


def prepare_rnn_params(w_i2h, b_i2h, w_i2o, b_i2o, input_size):
    """One-time (hoisted) weight prep: split the concat-Linear weights into their
    input / hidden parts, transpose to [in, out], fuse the two projections along
    the output axis, and pad the output axis to a lane-dense multiple of 128."""
    I = input_size
    H = w_i2h.shape[0]
    O = w_i2o.shape[0]
    n_pad = _round_up(H + O, 128)

    w_fused = jnp.concatenate([w_i2h.T, w_i2o.T], axis=1)         # [I+H, H+O]
    b_fused = jnp.concatenate([b_i2h, b_i2o]).reshape(1, H + O)   # [1,  H+O]

    pad = n_pad - (H + O)
    wx = jnp.pad(w_fused[:I], ((0, 0), (0, pad)))   # [I, n_pad]
    wh = jnp.pad(w_fused[I:], ((0, 0), (0, pad)))   # [H, n_pad]
    b = jnp.pad(b_fused, ((0, 0), (0, pad)))        # [1, n_pad]
    return wx, wh, b


def rnn_forward_sequence(xs, h0, wx, wh, b, *, hidden_size, output_size):
    """Run the RNN cell over a full sequence inside a single pallas_call.

    xs: [T, B, I], h0: [B, H].
    Returns (log_probs [T, B, O], h_final [B, H])."""
    T, B, I = xs.shape
    H, O = hidden_size, output_size
    n_pad = wx.shape[1]
    b_pad = _round_up(max(B, 8), 8)     # pad batch to the 8-row sublane granularity

    if b_pad != B:
        xs = jnp.pad(xs, ((0, 0), (0, b_pad - B), (0, 0)))
        h0 = jnp.pad(h0, ((0, b_pad - B), (0, 0)))

    kernel = functools.partial(rnn_seq_kernel, hidden_size=H, output_size=O)

    slab = pl.pallas_call(
        kernel,
        out_shape=jax.ShapeDtypeStruct((T, b_pad, n_pad), jnp.float32),
        grid_spec=pltpu.PrefetchScalarGridSpec(
            num_scalar_prefetch=0,
            grid=(T,),
            in_specs=[
                pl.BlockSpec((1, b_pad, I), lambda t: (t, 0, 0)),   # x_t  (tiled over time)
                pl.BlockSpec((b_pad, H), lambda t: (0, 0)),         # h0   (resident)
                pl.BlockSpec((I, n_pad), lambda t: (0, 0)),         # Wx   (resident)
                pl.BlockSpec((H, n_pad), lambda t: (0, 0)),         # Wh   (resident)
                pl.BlockSpec((1, n_pad), lambda t: (0, 0)),         # bias (resident)
            ],
            out_specs=pl.BlockSpec((1, b_pad, n_pad), lambda t: (t, 0, 0)),
            scratch_shapes=[pltpu.VMEM((b_pad, H), jnp.float32)],   # carried hidden state
        ),
        compiler_params=pltpu.CompilerParams(
            dimension_semantics=("arbitrary",),      # time is inherently sequential
            vmem_limit_bytes=32 * 1024 * 1024,
        ),
    )(xs, h0, wx, wh, b)

    log_probs = slab[:, :B, H:H + O]
    h_final = slab[T - 1, :B, :H]
    return log_probs, h_final


def rnn_forward(x, h, wx, wh, b, *, hidden_size, output_size):
    """Single-step forward matching the PyTorch module: returns (output, hidden')."""
    log_probs, h_new = rnn_forward_sequence(
        x[None], h, wx, wh, b, hidden_size=hidden_size, output_size=output_size)
    return log_probs[0], h_new


def init_hidden(hidden_size):
    # mirrors RNN.initHidden: zeros of shape (1, hidden_size)
    return jnp.zeros((1, hidden_size), jnp.float32)


if __name__ == "__main__":
    input_size, hidden_size, output_size = 16, 32, 8
    batch, seq_len = 2, 8

    key = jax.random.PRNGKey(0)
    k_x, k_h, k_w1, k_b1, k_w2, k_b2 = jax.random.split(key, 6)

    xs = jax.random.normal(k_x, (seq_len, batch, input_size), jnp.float32)
    h0 = jax.random.normal(k_h, (batch, hidden_size), jnp.float32)

    # PyTorch Linear shapes: [out_features, in_features] over the concat input.
    fan_in = input_size + hidden_size
    bound = 1.0 / (fan_in ** 0.5)
    w_i2h = jax.random.uniform(k_w1, (hidden_size, fan_in), jnp.float32, -bound, bound)
    b_i2h = jax.random.uniform(k_b1, (hidden_size,), jnp.float32, -bound, bound)
    w_i2o = jax.random.uniform(k_w2, (output_size, fan_in), jnp.float32, -bound, bound)
    b_i2o = jax.random.uniform(k_b2, (output_size,), jnp.float32, -bound, bound)

    # Hoisted once (NOT per step): split / transpose / fuse / pad the weights.
    wx, wh, b = prepare_rnn_params(w_i2h, b_i2h, w_i2o, b_i2o, input_size)

    # Full sequence in a single pallas_call (grid over time, hidden in scratch).
    log_probs, h_final = rnn_forward_sequence(
        xs, h0, wx, wh, b, hidden_size=hidden_size, output_size=output_size)
    jax.block_until_ready((log_probs, h_final))

    # Single-step API matching the original module's forward(input, hidden).
    out_step, h_step = rnn_forward(
        xs[0], h0, wx, wh, b, hidden_size=hidden_size, output_size=output_size)
    jax.block_until_ready((out_step, h_step))

    # Pure-JAX reference (per-step loop with the original concat formulation).
    h_ref = h0
    ref_outs = []
    for t in range(seq_len):
        combined = jnp.concatenate([xs[t], h_ref], axis=1)
        logits = combined @ w_i2o.T + b_i2o
        h_ref = combined @ w_i2h.T + b_i2h
        ref_outs.append(jax.nn.log_softmax(logits, axis=1))
        if t == 0:
            h1_ref = h_ref
    ref_outs = jnp.stack(ref_outs)

    assert jnp.allclose(log_probs, ref_outs, atol=1e-5), "sequence output mismatch"
    assert jnp.allclose(h_final, h_ref, atol=1e-5), "final hidden mismatch"
    assert jnp.allclose(out_step, ref_outs[0], atol=1e-5), "single-step output mismatch"
    assert jnp.allclose(h_step, h1_ref, atol=1e-5), "single-step hidden mismatch"

    print("KERNEL_OK")
</pallas_src>

<mosaic_0001>
module attributes {stable_mosaic.version = 11 : i64} {
  func.func @rnn_seq_kernel(%arg0: i32, %arg1: memref<1x8x16xf32, #tpu.memory_space<vmem>>, %arg2: memref<8x32xf32, #tpu.memory_space<vmem>>, %arg3: memref<16x128xf32, #tpu.memory_space<vmem>>, %arg4: memref<32x128xf32, #tpu.memory_space<vmem>>, %arg5: memref<1x128xf32, #tpu.memory_space<vmem>>, %arg6: memref<1x8x128xf32, #tpu.memory_space<vmem>>, %arg7: memref<8x32xf32, #tpu.memory_space<vmem>>) attributes {dimension_semantics = [#tpu.dimension_semantics<arbitrary>], iteration_bounds = array<i64: 8>, scalar_prefetch = 0 : i64, scratch_operands = 1 : i64, tpu.core_type = #tpu.core_type<tc>, window_params = [{transform_indices = @transform_0, window_bounds = array<i64: 1, 8, 16>}, {pipeline_mode = #tpu.pipeline_mode<synchronous>, transform_indices = @transform_1, window_bounds = array<i64: 8, 32>}, {pipeline_mode = #tpu.pipeline_mode<synchronous>, transform_indices = @transform_2, window_bounds = array<i64: 16, 128>}, {pipeline_mode = #tpu.pipeline_mode<synchronous>, transform_indices = @transform_3, window_bounds = array<i64: 32, 128>}, {pipeline_mode = #tpu.pipeline_mode<synchronous>, transform_indices = @transform_4, window_bounds = array<i64: 1, 128>}, {transform_indices = @transform_5, window_bounds = array<i64: 1, 8, 128>}]} {
    %c0_i32 = arith.constant 0 : i32
    %0 = arith.cmpi eq, %arg0, %c0_i32 : i32
    %1 = arith.extui %0 : i1 to i32
    %c0_i32_0 = arith.constant 0 : i32
    %2 = arith.cmpi ne, %1, %c0_i32_0 : i32
    scf.if %2 {
      %c0_22 = arith.constant 0 : index
      %c0_23 = arith.constant 0 : index
      %42 = vector.load %arg2[%c0_22, %c0_23] : memref<8x32xf32, #tpu.memory_space<vmem>>, vector<8x32xf32>
      %c0_24 = arith.constant 0 : index
      %c0_25 = arith.constant 0 : index
      %43 = vector.load %arg7[%c0_24, %c0_25] : memref<8x32xf32, #tpu.memory_space<vmem>>, vector<8x32xf32>
      tpu.vector_store %arg7[%c0_24, %c0_25], %42 {strides = array<i32>} : memref<8x32xf32, #tpu.memory_space<vmem>>, vector<8x32xf32>,
    } else {
    }
    %c0 = arith.constant 0 : index
    %c0_1 = arith.constant 0 : index
    %c0_2 = arith.constant 0 : index
    %3 = vector.load %arg1[%c0, %c0_1, %c0_2] : memref<1x8x16xf32, #tpu.memory_space<vmem>>, vector<1x8x16xf32>
    %4 = vector.shape_cast %3 : vector<1x8x16xf32> to vector<8x16xf32>
    %c0_3 = arith.constant 0 : index
    %c0_4 = arith.constant 0 : index
    %5 = vector.load %arg7[%c0_3, %c0_4] : memref<8x32xf32, #tpu.memory_space<vmem>>, vector<8x32xf32>
    %c0_5 = arith.constant 0 : index
    %c0_6 = arith.constant 0 : index
    %6 = vector.load %arg3[%c0_5, %c0_6] : memref<16x128xf32, #tpu.memory_space<vmem>>, vector<16x128xf32>
    %cst = arith.constant dense<0.000000e+00> : vector<8x128xf32>
    %7 = tpu.matmul %4, %6, %cst {dimension_numbers = #tpu.dot_dimension_numbers<[1], [0], [0], [1], [0, 0, 1, 1], [], []>} : vector<8x16xf32>, vector<16x128xf32>, vector<8x128xf32> -> vector<8x128xf32>
    %c0_7 = arith.constant 0 : index
    %c0_8 = arith.constant 0 : index
    %8 = vector.load %arg4[%c0_7, %c0_8] : memref<32x128xf32, #tpu.memory_space<vmem>>, vector<32x128xf32>
    %cst_9 = arith.constant dense<0.000000e+00> : vector<8x128xf32>
    %9 = tpu.matmul %5, %8, %cst_9 {dimension_numbers = #tpu.dot_dimension_numbers<[1], [0], [0], [1], [0, 0, 1, 1], [], []>} : vector<8x32xf32>, vector<32x128xf32>, vector<8x128xf32> -> vector<8x128xf32>
    %10 = arith.addf %7, %9 : vector<8x128xf32>
    %c0_10 = arith.constant 0 : index
    %c0_11 = arith.constant 0 : index
    %11 = vector.load %arg5[%c0_10, %c0_11] : memref<1x128xf32, #tpu.memory_space<vmem>>, vector<1x128xf32>
    %12 = vector.broadcast %11 : vector<1x128xf32> to vector<8x128xf32>
    %13 = arith.addf %10, %12 : vector<8x128xf32>
    %14 = tpu.iota {dimensions = array<i32: 1>} : vector<8x128xi32>
    %c32_i32 = arith.constant 32 : i32
    %15 = vector.broadcast %c32_i32 : i32 to vector<8x128xi32>
    %16 = arith.cmpi sge, %14, %15 : vector<8x128xi32>
    %c40_i32 = arith.constant 40 : i32
    %17 = vector.broadcast %c40_i32 : i32 to vector<8x128xi32>
    %18 = arith.cmpi slt, %14, %17 : vector<8x128xi32>
    %19 = arith.andi %16, %18 : vector<8x128xi1>
    %cst_12 = arith.constant 0xFF800000 : f32
    %20 = vector.broadcast %cst_12 : f32 to vector<8x128xf32>
    %21 = arith.select %19, %13, %20 : vector<8x128xi1>, vector<8x128xf32>
    %cst_13 = arith.constant dense<0xFF800000> : vector<8xf32>
    %22 = vector.multi_reduction <maximumf>, %21, %cst_13 [1] : vector<8x128xf32> to vector<8xf32>
    %23 = vector.shape_cast %22 : vector<8xf32> to vector<8x1xf32>
    %24 = vector.broadcast %23 : vector<8x1xf32> to vector<8x128xf32>
    %25 = arith.subf %13, %24 : vector<8x128xf32>
    %26 = math.exp %25 : vector<8x128xf32>
    %cst_14 = arith.constant 0.000000e+00 : f32
    %27 = vector.broadcast %cst_14 : f32 to vector<8x128xf32>
    %28 = arith.select %19, %26, %27 : vector<8x128xi1>, vector<8x128xf32>
    %cst_15 = arith.constant dense<0.000000e+00> : vector<8xf32>
    %29 = vector.multi_reduction <add>, %28, %cst_15 [1] : vector<8x128xf32> to vector<8xf32>
    %30 = vector.shape_cast %29 : vector<8xf32> to vector<8x1xf32>
    %31 = math.log %30 : vector<8x1xf32>
    %32 = vector.broadcast %31 : vector<8x1xf32> to vector<8x128xf32>
    %33 = arith.subf %25, %32 : vector<8x128xf32>
    %c32_i32_16 = arith.constant 32 : i32
    %34 = vector.broadcast %c32_i32_16 : i32 to vector<8x128xi32>
    %35 = arith.cmpi slt, %14, %34 : vector<8x128xi32>
    %36 = arith.select %35, %13, %33 : vector<8x128xi1>, vector<8x128xf32>
    %c0_17 = arith.constant 0 : index
    %c0_18 = arith.constant 0 : index
    %c0_19 = arith.constant 0 : index
    %37 = vector.load %arg6[%c0_17, %c0_18, %c0_19] : memref<1x8x128xf32, #tpu.memory_space<vmem>>, vector<1x8x128xf32>
    %38 = vector.shape_cast %37 : vector<1x8x128xf32> to vector<8x128xf32>
    %39 = vector.shape_cast %36 : vector<8x128xf32> to vector<1x8x128xf32>
    tpu.vector_store %arg6[%c0_17, %c0_18, %c0_19], %39 {strides = array<i32>} : memref<1x8x128xf32, #tpu.memory_space<vmem>>, vector<1x8x128xf32>,
    %40 = vector.extract_strided_slice %13 {offsets = [0, 0], sizes = [8, 32], strides = [1, 1]} : vector<8x128xf32> to vector<8x32xf32>
    %c0_20 = arith.constant 0 : index
    %c0_21 = arith.constant 0 : index
    %41 = vector.load %arg7[%c0_20, %c0_21] : memref<8x32xf32, #tpu.memory_space<vmem>>, vector<8x32xf32>
    tpu.vector_store %arg7[%c0_20, %c0_21], %40 {strides = array<i32>} : memref<8x32xf32, #tpu.memory_space<vmem>>, vector<8x32xf32>,
    return
  }
  func.func @transform_0(%arg0: i32) -> (i32, i32, i32) {
    %c0_i32 = arith.constant 0 : i32
    %c0_i32_0 = arith.constant 0 : i32
    %c0_i32_1 = arith.constant 0 : i32
    return %arg0, %c0_i32, %c0_i32_0 : i32, i32, i32
  }
  func.func @transform_1(%arg0: i32) -> (i32, i32) {
    %c0_i32 = arith.constant 0 : i32
    %c0_i32_0 = arith.constant 0 : i32
    %c0_i32_1 = arith.constant 0 : i32
    return %c0_i32, %c0_i32_0 : i32, i32
  }
  func.func @transform_2(%arg0: i32) -> (i32, i32) {
    %c0_i32 = arith.constant 0 : i32
    %c0_i32_0 = arith.constant 0 : i32
    %c0_i32_1 = arith.constant 0 : i32
    return %c0_i32, %c0_i32_0 : i32, i32
  }
  func.func @transform_3(%arg0: i32) -> (i32, i32) {
    %c0_i32 = arith.constant 0 : i32
    %c0_i32_0 = arith.constant 0 : i32
    %c0_i32_1 = arith.constant 0 : i32
    return %c0_i32, %c0_i32_0 : i32, i32
  }
  func.func @transform_4(%arg0: i32) -> (i32, i32) {
    %c0_i32 = arith.constant 0 : i32
    %c0_i32_0 = arith.constant 0 : i32
    %c0_i32_1 = arith.constant 0 : i32
    return %c0_i32, %c0_i32_0 : i32, i32
  }
  func.func @transform_5(%arg0: i32) -> (i32, i32, i32) {
    %c0_i32 = arith.constant 0 : i32
    %c0_i32_0 = arith.constant 0 : i32
    %c0_i32_1 = arith.constant 0 : i32
    return %arg0, %c0_i32, %c0_i32_0 : i32, i32, i32
  }
}

</mosaic_0001>

<llo_original>
// kernel: tpu_custom_call.1
$region0: #{tpu_custom_call.1}
  #allocation0 [shape = 'u32[]', space=smem, size = 0x4, offset = 0x4, fixed_abs, tag = 'smem constant byte address 0x4 - core index']
  #allocation1 [shape = 'u32[144,128]{1,0:T(1,128)}', space=vmem, size = 0x12000, scoped, tag = 'internal scratch']
  #allocation2 [shape = 'f32[8,32]{1,0:T(8,128)}', space=vmem, size = 0x1000, scoped, tag = 'scratch operand']
  %s0 = inlined_call_operand.hbm [shape: f32[8,8,16], index: 0, kind: input, shape index: {}]
  %s1 = inlined_call_operand.hbm [shape: f32[8,32], index: 1, kind: input, shape index: {}]
  %s2 = inlined_call_operand.hbm [shape: f32[16,128], index: 2, kind: input, shape index: {}]
  %s3 = inlined_call_operand.hbm [shape: f32[32,128], index: 3, kind: input, shape index: {}]
  %s4 = inlined_call_operand.vmem [shape: f32[1,128], index: 4, kind: input, shape index: {}]
  %s5 = inlined_call_operand.hbm [shape: f32[8,8,128], index: 5, kind: output, shape index: {}]
  %s6 = sld [smem:[#allocation0]]
  $region73: #{tpu_custom_call.1} parent=0
    _
  %s8 = ssub.s32 1, %s6
  %s9 = scalar_select 0, %s8, %s6
  $region1: #{tpu_custom_call.1} parent=0
    #allocation3 [shape = 'u8[8192]{0}', space=vmem, size = 0x2000, scoped, tag = 'input window, operand 0']
    #allocation4 [shape = 's32[2]{0}', space=sflag, size = 0x8, scoped, tag = 'scoped memory for tpu_custom_call.1']
    #allocation5 [shape = 's32[2]{0}', space=sflag, size = 0x8, scoped, tag = 'scoped memory for tpu_custom_call.1']
    #allocation6 [shape = 'u8[4096]{0}', space=vmem, size = 0x1000, scoped, tag = 'input window, operand 1, single buffered']
    #allocation7 [shape = 's32[1]{0}', space=sflag, size = 0x4, scoped, tag = 'scoped memory for tpu_custom_call.1']
    #allocation8 [shape = 'u8[8192]{0}', space=vmem, size = 0x2000, scoped, tag = 'input window, operand 2, single buffered']
    #allocation9 [shape = 'u8[16384]{0}', space=vmem, size = 0x4000, scoped, tag = 'input window, operand 3, single buffered']
    #allocation10 [shape = 's32[1]{0}', space=sflag, size = 0x4, scoped, tag = 'scoped memory for tpu_custom_call.1']
    #allocation11 [shape = 'u8[8192]{0}', space=vmem, size = 0x2000, scoped, tag = 'output window, operand 0']
    %10 = vsyncpa [#allocation4], 0
    %s11 = scalar_lea.sflag [#allocation4], 1
    %12 = vsyncpa %s11, 0
    %13 = vsyncpa [#allocation7], 0
    %14 = vsyncpa [#allocation10], 0
    %15 = vsyncpa [#allocation5], 0
    %s16 = scalar_lea.sflag [#allocation5], 1
    %17 = vsyncpa %s16, 0
    loop: start=0, step=1, limit=10
    $region2: #{tpu_custom_call.1} parent=1 // loop_pre_header
      _
    $region3: #{tpu_custom_call.1} parent=1 // loop_header
      %s19 = sphi 0, %s23
      %p20 = scmp.ge.s32.totalorder %s19, 10
      %s29 = sphi 0, %s31
      %s32 = sphi 0, %s29
      %s33 = sphi 0, %s32
      %s49 = sphi 0, %s33
      %s53 = sphi 0, %s53
      %s55 = sphi 0, %s53
      %s56 = sphi 0, %s55
      %s70 = sphi 0, %s56
      %s74 = sphi 0, %s74
      %s76 = sphi 0, %s74
      %s77 = sphi 0, %s76
      %s91 = sphi 0, %s77
      %s95 = sphi 0, %s95
      %s97 = sphi 0, %s95
      %s98 = sphi 0, %s97
      %s112 = sphi 0, %s98
      %s116 = sphi 0, %s116
      %s118 = sphi 0, %s116
      %s119 = sphi 0, %s118
      %s133 = sphi 0, %s119
      %s139 = sphi 0, %s141
      %s142 = sphi 0, %s139
      %s143 = sphi 0, %s142
      %s159 = sphi 0, %s143
    $region4: #{tpu_custom_call.1} parent=1 // loop_header_branch
      %22 = sbr.rel (%p20) target = $region8
    $region5: #{tpu_custom_call.1} parent=1 // loop_body
      %s24 = ssub.s32 %s19, 1
      %s25 = ssub.s32 %s19, 2
      %s26 = sadd.s32 %s19, 1
      %s27 = ssub.s32 %s19, %s26
      %p28 = scmp.eq.s32.totalorder %s27, 0
      %s30 = sadd.s32 %s29, 1
      %s31 = scalar_select %p28, %s29, %s30
      %p34 = pneg %p28
      %p35 = scmp.eq.s32.totalorder %s19, 7
      %p36 = por %p34, %p35
      %p37 = scmp.ne.s32.totalorder %s29, %s32
      %p38 = scmp.eq.s32.totalorder %s19, 0
      %p39 = por %p37, %p38
      %p40 = scmp.ne.s32.totalorder %s29, %s32
      %p41 = scmp.eq.s32.totalorder %s24, 7
      %p42 = por %p40, %p41
      %p43 = scmp.ne.s32.totalorder %s32, %s33
      %p44 = scmp.eq.s32.totalorder %s24, 0
      %p45 = por %p43, %p44
      %p46 = scmp.ne.s32.totalorder %s32, %s33
      %p47 = scmp.eq.s32.totalorder %s25, 7
      %p48 = por %p46, %p47
      %p50 = scmp.ne.s32.totalorder %s33, %s49
      %p51 = scmp.eq.s32.totalorder %s25, 0
      %p52 = por %p50, %p51
      %s54 = sadd.s32 %s53, 1
      %p57 = scmp.eq.s32.totalorder %s19, 7
      %p58 = scmp.ne.s32.totalorder %s53, %s55
      %p59 = scmp.eq.s32.totalorder %s19, 0
      %p60 = por %p58, %p59
      %p61 = scmp.ne.s32.totalorder %s53, %s55
      %p62 = scmp.eq.s32.totalorder %s24, 7
      %p63 = por %p61, %p62
      %p64 = scmp.ne.s32.totalorder %s55, %s56
      %p65 = scmp.eq.s32.totalorder %s24, 0
      %p66 = por %p64, %p65
      %p67 = scmp.ne.s32.totalorder %s55, %s56
      %p68 = scmp.eq.s32.totalorder %s25, 7
      %p69 = por %p67, %p68
      %p71 = scmp.ne.s32.totalorder %s56, %s70
      %p72 = scmp.eq.s32.totalorder %s25, 0
      %p73 = por %p71, %p72
      %s75 = sadd.s32 %s74, 1
      %p78 = scmp.eq.s32.totalorder %s19, 7
      %p79 = scmp.ne.s32.totalorder %s74, %s76
      %p80 = scmp.eq.s32.totalorder %s19, 0
      %p81 = por %p79, %p80
      %p82 = scmp.ne.s32.totalorder %s74, %s76
      %p83 = scmp.eq.s32.totalorder %s24, 7
      %p84 = por %p82, %p83
      %p85 = scmp.ne.s32.totalorder %s76, %s77
      %p86 = scmp.eq.s32.totalorder %s24, 0
      %p87 = por %p85, %p86
      %p88 = scmp.ne.s32.totalorder %s76, %s77
      %p89 = scmp.eq.s32.totalorder %s25, 7
      %p90 = por %p88, %p89
      %p92 = scmp.ne.s32.totalorder %s77, %s91
      %p93 = scmp.eq.s32.totalorder %s25, 0
      %p94 = por %p92, %p93
      %s96 = sadd.s32 %s95, 1
      %p99 = scmp.eq.s32.totalorder %s19, 7
      %p100 = scmp.ne.s32.totalorder %s95, %s97
      %p101 = scmp.eq.s32.totalorder %s19, 0
      %p102 = por %p100, %p101
      %p103 = scmp.ne.s32.totalorder %s95, %s97
      %p104 = scmp.eq.s32.totalorder %s24, 7
      %p105 = por %p103, %p104
      %p106 = scmp.ne.s32.totalorder %s97, %s98
      %p107 = scmp.eq.s32.totalorder %s24, 0
      %p108 = por %p106, %p107
      %p109 = scmp.ne.s32.totalorder %s97, %s98
      %p110 = scmp.eq.s32.totalorder %s25, 7
      %p111 = por %p109, %p110
      %p113 = scmp.ne.s32.totalorder %s98, %s112
      %p114 = scmp.eq.s32.totalorder %s25, 0
      %p115 = por %p113, %p114
      %s117 = sadd.s32 %s116, 1
      %p120 = scmp.eq.s32.totalorder %s19, 7
      %p121 = scmp.ne.s32.totalorder %s116, %s118
      %p122 = scmp.eq.s32.totalorder %s19, 0
      %p123 = por %p121, %p122
      %p124 = scmp.ne.s32.totalorder %s116, %s118
      %p125 = scmp.eq.s32.totalorder %s24, 7
      %p126 = por %p124, %p125
      %p127 = scmp.ne.s32.totalorder %s118, %s119
      %p128 = scmp.eq.s32.totalorder %s24, 0
      %p129 = por %p127, %p128
      %p130 = scmp.ne.s32.totalorder %s118, %s119
      %p131 = scmp.eq.s32.totalorder %s25, 7
      %p132 = por %p130, %p131
      %p134 = scmp.ne.s32.totalorder %s119, %s133
      %p135 = scmp.eq.s32.totalorder %s25, 0
      %p136 = por %p134, %p135
      %s137 = ssub.s32 %s19, %s26
      %p138 = scmp.eq.s32.totalorder %s137, 0
      %s140 = sadd.s32 %s139, 1
      %s141 = scalar_select %p138, %s139, %s140
      %p144 = pneg %p138
      %p145 = scmp.eq.s32.totalorder %s19, 7
      %p146 = por %p144, %p145
      %p147 = scmp.ne.s32.totalorder %s139, %s142
      %p148 = scmp.eq.s32.totalorder %s19, 0
      %p149 = por %p147, %p148
      %p150 = scmp.ne.s32.totalorder %s139, %s142
      %p151 = scmp.eq.s32.totalorder %s24, 7
      %p152 = por %p150, %p151
      %p153 = scmp.ne.s32.totalorder %s142, %s143
      %p154 = scmp.eq.s32.totalorder %s24, 0
      %p155 = por %p153, %p154
      %p156 = scmp.ne.s32.totalorder %s142, %s143
      %p157 = scmp.eq.s32.totalorder %s25, 7
      %p158 = por %p156, %p157
      %p160 = scmp.ne.s32.totalorder %s143, %s159
      %p161 = scmp.eq.s32.totalorder %s25, 0
      %p162 = por %p160, %p161
      %p163 = scmp.le.s32.totalorder 1, %s19
      %p164 = scmp.lt.s32.totalorder %s19, 9
      %p165 = pnand %p163, %p164
      %p166 = pneg %p165
      // Predicated region
      $region9: #{tpu_custom_call.1} parent=5 // pred_check
        _
      $region10: #{tpu_custom_call.1} parent=5 // pred_check_branch
        %168 = sbr.rel (%p165) target = $region12
      $region11: #{tpu_custom_call.1} parent=5 // pred_region
        %s169 = ssub.s32 %s19, 1
        // Predicated region
        $region13: #{tpu_custom_call.1} parent=11 // pred_check
          %p170 = pneg %p66
        $region14: #{tpu_custom_call.1} parent=11 // pred_check_branch
          %172 = sbr.rel (%p170) target = $region16
        $region15: #{tpu_custom_call.1} parent=11 // pred_region
          %s174 = ssub.s32 128, 128
          %175 = vsyncadd [#allocation7], %s174
          %s177 = sshll.u32 [#allocation6], 4
          %s178 = int_to_ptr.vmem [resolvable:$true] %s177
          %180 = dma.hbm_to_vmem [thread:$0]  %s1, 128, %s178, [#allocation7]
        $region16: #{tpu_custom_call.1} parent=11 // pred_fallthru
          _
        // Predicated region
        $region17: #{tpu_custom_call.1} parent=11 // pred_check
          %p181 = pneg %p87
        $region18: #{tpu_custom_call.1} parent=11 // pred_check_branch
          %183 = sbr.rel (%p181) target = $region20
        $region19: #{tpu_custom_call.1} parent=11 // pred_region
          %s185 = ssub.s32 256, 256
          %186 = vsyncadd [#allocation7], %s185
          %s187 = sshll.u32 [#allocation8], 4
          %s188 = int_to_ptr.vmem [resolvable:$true] %s187
          %193 = dma.hbm_to_vmem [thread:$0]  %s2, 256, %s188, [#allocation7], 128, 128, 8
        $region20: #{tpu_custom_call.1} parent=11 // pred_fallthru
          _
        // Predicated region
        $region21: #{tpu_custom_call.1} parent=11 // pred_check
          %p194 = pneg %p108
        $region22: #{tpu_custom_call.1} parent=11 // pred_check_branch
          %196 = sbr.rel (%p194) target = $region24
        $region23: #{tpu_custom_call.1} parent=11 // pred_region
          %s198 = ssub.s32 512, 512
          %199 = vsyncadd [#allocation10], %s198
          %s200 = sshll.u32 [#allocation9], 4
          %s201 = int_to_ptr.vmem [resolvable:$true] %s200
          %206 = dma.hbm_to_vmem [thread:$0]  %s3, 512, %s201, [#allocation10], 128, 128, 8
        $region24: #{tpu_custom_call.1} parent=11 // pred_fallthru
          _
        // Predicated region
        $region25: #{tpu_custom_call.1} parent=11 // pred_check
          %p207 = pneg %p129
        $region26: #{tpu_custom_call.1} parent=11 // pred_check_branch
          %209 = sbr.rel (%p207) target = $region28
        $region27: #{tpu_custom_call.1} parent=11 // pred_region
          _
        $region28: #{tpu_custom_call.1} parent=11 // pred_fallthru
          _
      $region12: #{tpu_custom_call.1} parent=5 // pred_fallthru
        _
      %p210 = scmp.lt.s32.totalorder %s19, 8
      // Predicated region
      $region29: #{tpu_custom_call.1} parent=5 // pred_check
        %p211 = pneg %p210
      $region30: #{tpu_custom_call.1} parent=5 // pred_check_branch
        %213 = sbr.rel (%p211) target = $region32
      $region31: #{tpu_custom_call.1} parent=5 // pred_region
        // Predicated region
        $region33: #{tpu_custom_call.1} parent=31 // pred_check
          %p214 = pneg %p39
        $region34: #{tpu_custom_call.1} parent=31 // pred_check_branch
          %216 = sbr.rel (%p214) target = $region36
        $region35: #{tpu_custom_call.1} parent=31 // pred_region
          %s217 = sand.u32 %s29, 1
          %s218 = scalar_lea.sflag [#allocation4], %s217
          %s219 = sand.u32 %s29, 1
          %s220 = smul.addr %s219, 8
          %s221 = scalar_lea.vmem [#allocation3], %s220
          %s223 = ssub.s32 128, 128
          %224 = vsyncadd %s218, %s223
          %s225 = smul.addr %s19, 128
          %s226 = scalar_lea.hbm %s0, %s225
          %s228 = sshll.u32 %s221, 4
          %s229 = int_to_ptr.vmem [resolvable:$true] %s228
          %231 = dma.hbm_to_vmem [thread:$0]  %s226, 128, %s229, %s218
        $region36: #{tpu_custom_call.1} parent=31 // pred_fallthru
          _
      $region32: #{tpu_custom_call.1} parent=5 // pred_fallthru
        _
      %p232 = scmp.le.s32.totalorder 1, %s19
      %p233 = scmp.lt.s32.totalorder %s19, 9
      %p234 = pnand %p232, %p233
      %p235 = pneg %p234
      // Predicated region
      $region37: #{tpu_custom_call.1} parent=5 // pred_check
        _
      $region38: #{tpu_custom_call.1} parent=5 // pred_check_branch
        %237 = sbr.rel (%p234) target = $region40
      $region39: #{tpu_custom_call.1} parent=5 // pred_region
        %s238 = ssub.s32 %s19, 1
        %s239 = sand.u32 %s32, 1
        %s240 = scalar_lea.sflag [#allocation4], %s239
        %s241 = sand.u32 %s32, 1
        %s242 = smul.addr %s241, 8
        %s243 = scalar_lea.vmem [#allocation3], %s242
        // Predicated region
        $region41: #{tpu_custom_call.1} parent=39 // pred_check
          %p244 = pneg %p45
        $region42: #{tpu_custom_call.1} parent=39 // pred_check_branch
          %246 = sbr.rel (%p244) target = $region44
        $region43: #{tpu_custom_call.1} parent=39 // pred_region
          %247 = dma.done %s240, 128
        $region44: #{tpu_custom_call.1} parent=39 // pred_fallthru
          _
        // Predicated region
        $region45: #{tpu_custom_call.1} parent=39 // pred_check
          %p248 = pneg %p66
        $region46: #{tpu_custom_call.1} parent=39 // pred_check_branch
          %250 = sbr.rel (%p248) target = $region48
        $region47: #{tpu_custom_call.1} parent=39 // pred_region
          %251 = dma.done [#allocation7], 128
        $region48: #{tpu_custom_call.1} parent=39 // pred_fallthru
          _
        // Predicated region
        $region49: #{tpu_custom_call.1} parent=39 // pred_check
          %p252 = pneg %p87
        $region50: #{tpu_custom_call.1} parent=39 // pred_check_branch
          %254 = sbr.rel (%p252) target = $region52
        $region51: #{tpu_custom_call.1} parent=39 // pred_region
          %255 = dma.done [#allocation7], 256
        $region52: #{tpu_custom_call.1} parent=39 // pred_fallthru
          _
        // Predicated region
        $region53: #{tpu_custom_call.1} parent=39 // pred_check
          %p256 = pneg %p108
        $region54: #{tpu_custom_call.1} parent=39 // pred_check_branch
          %258 = sbr.rel (%p256) target = $region56
        $region55: #{tpu_custom_call.1} parent=39 // pred_region
          %259 = dma.done [#allocation10], 512
        $region56: #{tpu_custom_call.1} parent=39 // pred_fallthru
          _
        %s260 = sand.u32 %s32, 1
        %s261 = scalar_lea.sflag [#allocation4], %s260
        %s262 = sand.u32 %s32, 1
        %s263 = smul.addr %s262, 8
        %s264 = scalar_lea.vmem [#allocation3], %s263
        %p265 = pneg %p45
        %p266 = pneg %p42
        %p267 = pneg %p66
        %p268 = pneg %p63
        %p269 = pneg %p87
        %p270 = pneg %p84
        %p271 = pneg %p108
        %p272 = pneg %p105
        %p273 = pneg %p129
        %p274 = pneg %p126
        %p275 = pneg %p155
        %p276 = pneg %p152
        %s277 = sand.u32 %s142, 1
        %s278 = scalar_lea.sflag [#allocation5], %s277
        %s279 = sand.u32 %s142, 1
        %s280 = smul.addr %s279, 8
        %s281 = scalar_lea.vmem [#allocation11], %s280
        %p282 = scmp.eq.s32.totalorder %s24, 0
        // Predicated region
        $region57: #{tpu_custom_call.1} parent=39 // pred_check
          %p283 = pneg %p282
        $region58: #{tpu_custom_call.1} parent=39 // pred_check_branch
          %285 = sbr.rel (%p283) target = $region60
        $region59: #{tpu_custom_call.1} parent=39 // pred_region
          %v286 = vld [vmem:[#allocation6] sm:$0xff]
          %vm287 = vcmask 261120
          %288 = vst.msk [vmem:[#allocation2] sm:$0xff] %vm287, %v286
        $region60: #{tpu_custom_call.1} parent=39 // pred_fallthru
          _
        %v289 = vld [vmem:[%s243] sm:$0xff]
        %v290 = vld [vmem:[#allocation2] sm:$0xff]
        %v291 = vld [vmem:[#allocation8] sm:$0xff]
        %v292 = vld [vmem:[#allocation8 + $0x8] sm:$0xff]
        %v293 = vld [vmem:[#allocation9] sm:$0xff]
        %v294 = vld [vmem:[#allocation9 + $0x8] sm:$0xff]
        %v295 = vld [vmem:[#allocation9 + $0x10] sm:$0xff]
        %v296 = vld [vmem:[#allocation9 + $0x18] sm:$0xff]
        %vm297 = vcmask 261120
        %v299 = vsel %vm297, %v290, 0
        %301 = vmatprep.subr.mxu0 0.0
        %302 = vmatpush1.msra.mxu0 %v293
        %303 = vmatprep.subr.mxu0 0.0
        %304 = vmatpush1.msra.mxu0 %v294
        %305 = vmatprep.subr.mxu0 0.0
        %306 = vmatpush1.msra.mxu0 %v295
        %307 = vmatprep.subr.mxu0 0.0
        %308 = vmatpush1.msra.mxu0 %v296
        %309 = vmatprep.subr.mxu0 0.0
        %310 = vmatpush1.msra.mxu0 0.0
        %311 = vmatprep.subr.mxu0 0.0
        %312 = vmatpush1.msra.mxu0 0.0
        %313 = vmatprep.subr.mxu0 0.0
        %314 = vmatpush1.msra.mxu0 0.0
        %315 = vmatprep.subr.mxu0 0.0
        %316 = vmatpush1.msra.mxu0 0.0
        %317 = vmatprep.subr.mxu0 0.0
        %318 = vmatpush1.msra.mxu0 0.0
        %319 = vmatprep.subr.mxu0 0.0
        %320 = vmatpush1.msra.mxu0 0.0
        %321 = vmatprep.subr.mxu0 0.0
        %322 = vmatpush1.msra.mxu0 0.0
        %323 = vmatprep.subr.mxu0 0.0
        %324 = vmatpush1.msra.mxu0 0.0
        %325 = vmatprep.subr.mxu0 0.0
        %326 = vmatpush1.msra.mxu0 0.0
        %327 = vmatprep.subr.mxu0 0.0
        %328 = vmatpush1.msra.mxu0 0.0
        %329 = vmatprep.subr.mxu0 0.0
        %330 = vmatpush1.msra.mxu0 0.0
        %331 = vmatprep.subr.mxu0 0.0
        %332 = vmatpush1.msra.mxu0 0.0
        %333 = vmatprep.subr.mxu0 0.0
        %334 = vmatpush1.msra.mxu0 0.0
        %335 = vmatprep.subr.mxu0 0.0
        %336 = vmatpush1.msra.mxu0 0.0
        %337 = vmatprep.subr.mxu0 0.0
        %338 = vmatpush1.msra.mxu0 0.0
        %339 = vmatprep.subr.mxu0 0.0
        %340 = vmatpush1.msra.mxu0 0.0
        %341 = vmatprep.subr.mxu0 0.0
        %342 = vmatpush1.msra.mxu0 0.0
        %343 = vmatprep.subr.mxu0 0.0
        %344 = vmatpush1.msra.mxu0 0.0
        %345 = vmatprep.subr.mxu0 0.0
        %346 = vmatpush1.msra.mxu0 0.0
        %347 = vmatprep.subr.mxu0 0.0
        %348 = vmatpush1.msra.mxu0 0.0
        %349 = vmatprep.subr.mxu0 0.0
        %350 = vmatpush1.msra.mxu0 0.0
        %351 = vmatprep.subr.mxu0 0.0
        %352 = vmatpush1.msra.mxu0 0.0
        %353 = vmatprep.subr.mxu0 0.0
        %354 = vmatpush1.msra.mxu0 0.0
        %355 = vmatprep.subr.mxu0 0.0
        %356 = vmatpush1.msra.mxu0 0.0
        %357 = vmatprep.subr.mxu0 0.0
        %358 = vmatpush1.msra.mxu0 0.0
        %359 = vmatprep.subr.mxu0 0.0
        %360 = vmatpush1.msra.mxu0 0.0
        %361 = vmatprep.subr.mxu0 0.0
        %362 = vmatpush1.msra.mxu0 0.0
        %363 = vmatprep.subr.mxu0 0.0
        %364 = vmatpush1.msra.mxu0 0.0
        %365 = vmatprep.mubr.f32.mxu0 0.0
        %366 = vmatmul.mubr.f32.gmra.mrb[0].mxu0 %v299
        %v367 = vpop.f32.mrb[0].mxu0
        %v368 = vadd.f32 0.0, %v367
        %v369 = vpop.f32.mrb[0].mxu0
        %370 = vdwg.mxu0
        %vm371 = vcmask 130048
        %v373 = vsel %vm371, %v289, 0
        %375 = vmatprep.subr.mxu0 0.0
        %376 = vmatpush1.msra.mxu0 %v291
        %377 = vmatprep.subr.mxu0 0.0
        %378 = vmatpush1.msra.mxu0 %v292
        %379 = vmatprep.subr.mxu0 0.0
        %380 = vmatpush1.msra.mxu0 0.0
        %381 = vmatprep.subr.mxu0 0.0
        %382 = vmatpush1.msra.mxu0 0.0
        %383 = vmatprep.subr.mxu0 0.0
        %384 = vmatpush1.msra.mxu0 0.0
        %385 = vmatprep.subr.mxu0 0.0
        %386 = vmatpush1.msra.mxu0 0.0
        %387 = vmatprep.subr.mxu0 0.0
        %388 = vmatpush1.msra.mxu0 0.0
        %389 = vmatprep.subr.mxu0 0.0
        %390 = vmatpush1.msra.mxu0 0.0
        %391 = vmatprep.subr.mxu0 0.0
        %392 = vmatpush1.msra.mxu0 0.0
        %393 = vmatprep.subr.mxu0 0.0
        %394 = vmatpush1.msra.mxu0 0.0
        %395 = vmatprep.subr.mxu0 0.0
        %396 = vmatpush1.msra.mxu0 0.0
        %397 = vmatprep.subr.mxu0 0.0
        %398 = vmatpush1.msra.mxu0 0.0
        %399 = vmatprep.subr.mxu0 0.0
        %400 = vmatpush1.msra.mxu0 0.0
        %401 = vmatprep.subr.mxu0 0.0
        %402 = vmatpush1.msra.mxu0 0.0
        %403 = vmatprep.subr.mxu0 0.0
        %404 = vmatpush1.msra.mxu0 0.0
        %405 = vmatprep.subr.mxu0 0.0
        %406 = vmatpush1.msra.mxu0 0.0
        %407 = vmatprep.subr.mxu0 0.0
        %408 = vmatpush1.msra.mxu0 0.0
        %409 = vmatprep.subr.mxu0 0.0
        %410 = vmatpush1.msra.mxu0 0.0
        %411 = vmatprep.subr.mxu0 0.0
        %412 = vmatpush1.msra.mxu0 0.0
        %413 = vmatprep.subr.mxu0 0.0
        %414 = vmatpush1.msra.mxu0 0.0
        %415 = vmatprep.subr.mxu0 0.0
        %416 = vmatpush1.msra.mxu0 0.0
        %417 = vmatprep.subr.mxu0 0.0
        %418 = vmatpush1.msra.mxu0 0.0
        %419 = vmatprep.subr.mxu0 0.0
        %420 = vmatpush1.msra.mxu0 0.0
        %421 = vmatprep.subr.mxu0 0.0
        %422 = vmatpush1.msra.mxu0 0.0
        %423 = vmatprep.subr.mxu0 0.0
        %424 = vmatpush1.msra.mxu0 0.0
        %425 = vmatprep.subr.mxu0 0.0
        %426 = vmatpush1.msra.mxu0 0.0
        %427 = vmatprep.subr.mxu0 0.0
        %428 = vmatpush1.msra.mxu0 0.0
        %429 = vmatprep.subr.mxu0 0.0
        %430 = vmatpush1.msra.mxu0 0.0
        %431 = vmatprep.subr.mxu0 0.0
        %432 = vmatpush1.msra.mxu0 0.0
        %433 = vmatprep.subr.mxu0 0.0
        %434 = vmatpush1.msra.mxu0 0.0
        %435 = vmatprep.subr.mxu0 0.0
        %436 = vmatpush1.msra.mxu0 0.0
        %437 = vmatprep.subr.mxu0 0.0
        %438 = vmatpush1.msra.mxu0 0.0
        %439 = vmatprep.mubr.f32.mxu0 0.0
        %440 = vmatmul.mubr.f32.gmra.mrb[0].mxu0 %v373
        %v441 = vpop.f32.mrb[0].mxu0
        %v442 = vadd.f32 %v368, %v441
        %v443 = vpop.f32.mrb[0].mxu0
        %444 = vdwg.mxu0
        %v445 = vld [vmem:[%s4] sm:$0x1]
        %v447 = vlaneseq
        %v448 = vshrl.u32 %v447, 7
        %v449 = vsub.s32 0, %v448
        %v450 = vrot.slane %v445, %v449
        %v452 = vadd.f32 %v442, %v450
        %v453 = vlaneseq
        %v454 = vand.u32 %v453, 127
        %vm455 = vcmp.ge.s32.totalorder %v454, 32
        %vm456 = vcmp.lt.s32.totalorder %v454, 40
        %vm457 = vmand %vm455, %vm456
        %v458 = vsel %vm457, %v452, -inf
        %459 = vmax.xlane.f32.xlu0 %v458
        %v460 = vpop.xlane.xlu0 %459
        %v461 = vsub.f32 %v452, %v460
        %v462 = vmul.f32 %v461, 1.442695
        %v463 = vpow.pop %v462
        %v464 = vsel %vm457, %v463, 0.0
        %465 = vadd.xlane.f32.xlu0 %v464
        %v466 = vpop.xlane.xlu0 %465
        %v467 = vlog2.pop %v466
        %v468 = vmul.f32 %v467, 0.6931472
        %v469 = vsub.f32 %v461, %v468
        %vm470 = vcmp.lt.s32.totalorder %v454, 32
        %v471 = vsel %vm470, %v452, %v469
        %472 = vst [vmem:[%s281] sm:$0xff] %v471
        %473 = vst.msk [vmem:[#allocation2] sm:$0xff] %vm297, %v452
        %s474 = sand.u32 %s142, 1
        %s475 = scalar_lea.sflag [#allocation5], %s474
        %s476 = sand.u32 %s142, 1
        %s477 = smul.addr %s476, 8
        %s478 = scalar_lea.vmem [#allocation11], %s477
        // Predicated region
        $region61: #{tpu_custom_call.1} parent=39 // pred_check
          %p479 = pneg %p152
        $region62: #{tpu_custom_call.1} parent=39 // pred_check_branch
          %481 = sbr.rel (%p479) target = $region64
        $region63: #{tpu_custom_call.1} parent=39 // pred_region
          %s483 = ssub.s32 128, 128
          %484 = vsyncadd %s475, %s483
          %s485 = smul.addr %s24, 128
          %s486 = scalar_lea.hbm %s5, %s485
          %s488 = sshll.u32 %s478, 4
          %s489 = int_to_ptr.vmem [resolvable:$true] %s488
          %491 = dma.vmem_to_hbm [thread:$0]  %s489, 128, %s486, %s475
        $region64: #{tpu_custom_call.1} parent=39 // pred_fallthru
          _
      $region40: #{tpu_custom_call.1} parent=5 // pred_fallthru
        _
      %p492 = scmp.le.s32.totalorder 2, %s19
      // Predicated region
      $region65: #{tpu_custom_call.1} parent=5 // pred_check
        %p493 = pneg %p492
      $region66: #{tpu_custom_call.1} parent=5 // pred_check_branch
        %495 = sbr.rel (%p493) target = $region68
      $region67: #{tpu_custom_call.1} parent=5 // pred_region
        %s496 = ssub.s32 %s19, 2
        // Predicated region
        $region69: #{tpu_custom_call.1} parent=67 // pred_check
          %p497 = pneg %p158
        $region70: #{tpu_custom_call.1} parent=67 // pred_check_branch
          %499 = sbr.rel (%p497) target = $region72
        $region71: #{tpu_custom_call.1} parent=67 // pred_region
          %s500 = sand.u32 %s143, 1
          %s501 = scalar_lea.sflag [#allocation5], %s500
          %s502 = sand.u32 %s143, 1
          %s503 = smul.addr %s502, 8
          %s504 = scalar_lea.vmem [#allocation11], %s503
          %505 = dma.done %s501, 128
        $region72: #{tpu_custom_call.1} parent=67 // pred_fallthru
          _
      $region68: #{tpu_custom_call.1} parent=5 // pred_fallthru
        _
    $region6: #{tpu_custom_call.1} parent=1 // loop_footer
      %s23 = sadd.s32 1, %s19
    $region7: #{tpu_custom_call.1} parent=1 // loop_footer_branch
      %18 = sbr.rel target = $region3
    $region8: #{tpu_custom_call.1} parent=1 // loop_exit
      _
    %506 = vsyncpa [#allocation4], 1
    %s507 = scalar_lea.sflag [#allocation4], 1
    %508 = vsyncpa %s507, 1
    %509 = vsyncpa [#allocation7], 1
    %510 = vsyncpa [#allocation10], 1
    %511 = vsyncpa [#allocation5], 1
    %s512 = scalar_lea.sflag [#allocation5], 1
    %513 = vsyncpa %s512, 1

</llo_original>
